<compile_context>
chip_gen: v7x
topology: tpu7x:2x2x1
jax: 0.10.0
libtpu: 0.0.40
codegen_flags: <defaults>
</compile_context>

<pallas_src>
import jax
import jax.numpy as jnp
from jax.experimental import pallas as pl
from jax.experimental.pallas import tpu as pltpu

COMPUTE_DTYPE = jnp.bfloat16   # MXU input dtype; accumulation is always f32
TARGET_TM = 2048               # max batch-tile rows (VMEM-safe on v5e/v6e/v7x)
ROW_GRAN = 16                  # batch-tile row granularity


def _round_up(n, m):
    return ((n + m - 1) // m) * m


def _choose_tm(batch):
    """Pick the batch tile size.

    Small batches get a single (near-)exact tile; larger batches aim for at
    least two tiles so the "parallel" grid axis can be split across v7x's two
    TensorCores, capped at TARGET_TM for VMEM safety on every generation.
    """
    if batch < ROW_GRAN:
        return _round_up(max(batch, 1), 8)
    return min(TARGET_TM, _round_up(pl.cdiv(batch, 2), ROW_GRAN))


def autoencoder_kernel(x_ref,
                       w1_ref, b1_ref, w2_ref, b2_ref, w3_ref, b3_ref,
                       w4_ref, b4_ref, w5_ref, b5_ref, w6_ref, b6_ref,
                       o_ref):
    """One batch tile: full 6-layer forward pass; activations stay in VMEM/vregs."""

    def linear_relu(h, w_ref, b_ref):
        z = jnp.dot(h, w_ref[...], preferred_element_type=jnp.float32) + b_ref[...]
        return jnp.maximum(z, 0.0).astype(COMPUTE_DTYPE)

    # Cast to the MXU compute dtype here (not in the wrapper) so x is read from
    # HBM exactly once, in its native dtype.
    h = x_ref[...].astype(COMPUTE_DTYPE)
    # encoder: P -> 64 -> 32 -> 16 (ReLU after each)
    h = linear_relu(h, w1_ref, b1_ref)
    h = linear_relu(h, w2_ref, b2_ref)
    h = linear_relu(h, w3_ref, b3_ref)
    # decoder: 16 -> 32 -> 64 -> P (ReLU, ReLU, Sigmoid)
    h = linear_relu(h, w4_ref, b4_ref)
    h = linear_relu(h, w5_ref, b5_ref)
    z = jnp.dot(h, w6_ref[...], preferred_element_type=jnp.float32) + b6_ref[...]
    o_ref[...] = jax.nn.sigmoid(z).astype(o_ref.dtype)


@jax.jit
def autoencoder_forward(x, params):
    batch, num_properties = x.shape
    tm = _choose_tm(batch)
    grid = (pl.cdiv(batch, tm),)

    # x / out tiled along batch (ragged last tile: read-padded, write-clipped);
    # weights & biases get constant index_maps -> VMEM-resident, no per-step
    # re-DMA. Feature dim stays full-width (lane-dense 128-wide blocks).
    in_specs = [pl.BlockSpec((tm, num_properties), lambda i: (i, 0))]
    args = [x]
    for w, b in params:
        in_specs.append(pl.BlockSpec(w.shape, lambda i: (0, 0)))
        in_specs.append(pl.BlockSpec(b.shape, lambda i: (0, 0)))
        args.append(w.astype(COMPUTE_DTYPE))  # weights are tiny; cast cost negligible
        args.append(b)                        # biases stay f32

    itemsize_c = jnp.dtype(COMPUTE_DTYPE).itemsize
    weight_bytes = sum(w.size * itemsize_c + b.size * 4 for w, b in params)
    rows = grid[0] * tm
    flops = 2 * rows * sum(w.shape[0] * w.shape[1] for w, _ in params)
    bytes_accessed = (
        batch * num_properties * x.dtype.itemsize        # x in (native dtype)
        + batch * num_properties * 4                     # out (f32)
        + weight_bytes)

    # VMEM budget: double-buffered x/out tiles + resident weights + headroom.
    tile_bytes = tm * num_properties * (x.dtype.itemsize + 4)
    vmem_limit = int(min(32 * 1024 * 1024,
                         max(16 * 1024 * 1024,
                             2 * tile_bytes + weight_bytes + (4 << 20))))

    out = pl.pallas_call(
        autoencoder_kernel,
        out_shape=jax.ShapeDtypeStruct((batch, num_properties), jnp.float32),
        grid_spec=pltpu.PrefetchScalarGridSpec(
            num_scalar_prefetch=0,
            grid=grid,
            in_specs=in_specs,
            out_specs=pl.BlockSpec((tm, num_properties), lambda i: (i, 0)),
        ),
        compiler_params=pltpu.CompilerParams(
            dimension_semantics=("parallel",),  # v7x: shard batch tiles over 2 TCs
            vmem_limit_bytes=vmem_limit,
        ),
        cost_estimate=pl.CostEstimate(
            flops=flops,
            transcendentals=batch * num_properties,      # sigmoid
            bytes_accessed=bytes_accessed,
        ),
    )(*args)
    return out


def init_params(key, num_properties):
    """Deterministic init mimicking nn.Linear default (uniform +/- 1/sqrt(fan_in))."""
    dims = [num_properties, 64, 32, 16, 32, 64, num_properties]
    params = []
    for i in range(len(dims) - 1):
        fan_in, fan_out = dims[i], dims[i + 1]
        key, kw, kb = jax.random.split(key, 3)
        bound = 1.0 / (fan_in ** 0.5)
        w = jax.random.uniform(kw, (fan_in, fan_out), jnp.float32, -bound, bound)
        b = jax.random.uniform(kb, (1, fan_out), jnp.float32, -bound, bound)
        params.append((w, b))
    return params


def reference_forward_mixed(x, params):
    """Pure-JAX reference using the same bf16-input / f32-accumulate recipe."""
    h = x.astype(COMPUTE_DTYPE)
    for i, (w, b) in enumerate(params):
        z = jnp.dot(h.astype(jnp.float32),
                    w.astype(COMPUTE_DTYPE).astype(jnp.float32),
                    precision=jax.lax.Precision.HIGHEST) + b
        if i < len(params) - 1:
            h = jnp.maximum(z, 0.0).astype(COMPUTE_DTYPE)
        else:
            h = jax.nn.sigmoid(z)
    return h


def reference_forward_f32(x, params):
    """Pure f32 reference matching the original PyTorch module numerics."""
    h = x
    for i, (w, b) in enumerate(params):
        z = jnp.dot(h, w, precision=jax.lax.Precision.HIGHEST) + b
        h = jnp.maximum(z, 0.0) if i < len(params) - 1 else jax.nn.sigmoid(z)
    return h


if __name__ == "__main__":
    num_properties = 128   # number of "property" columns in the user-item matrix
    batch = 8              # number of users in this mini-batch

    key = jax.random.PRNGKey(0)
    key, kx = jax.random.split(key)
    # user-item interaction rows in [0, 1]
    x = jax.random.uniform(kx, (batch, num_properties), jnp.float32)

    params = init_params(key, num_properties)

    out = autoencoder_forward(x, params)
    out = jax.block_until_ready(out)

    assert out.shape == (batch, num_properties)

    # Tight check against a reference using the same bf16-input recipe.
    ref_mixed = reference_forward_mixed(x, params)
    assert jnp.allclose(out, ref_mixed, atol=2e-3, rtol=2e-3)

    # Loose sanity check against the full-f32 (PyTorch-equivalent) reference;
    # bf16 matmul inputs introduce ~1e-2-level differences at most.
    ref_f32 = reference_forward_f32(x, params)
    assert jnp.allclose(out, ref_f32, atol=5e-2, rtol=5e-2)

    print("KERNEL_OK")
</pallas_src>

<mosaic_0001>
module attributes {stable_mosaic.version = 11 : i64} {
  func.func @autoencoder_kernel(%arg0: i32, %arg1: memref<8x128xf32, #tpu.memory_space<vmem>>, %arg2: memref<128x64xbf16, #tpu.memory_space<vmem>>, %arg3: memref<1x64xf32, #tpu.memory_space<vmem>>, %arg4: memref<64x32xbf16, #tpu.memory_space<vmem>>, %arg5: memref<1x32xf32, #tpu.memory_space<vmem>>, %arg6: memref<32x16xbf16, #tpu.memory_space<vmem>>, %arg7: memref<1x16xf32, #tpu.memory_space<vmem>>, %arg8: memref<16x32xbf16, #tpu.memory_space<vmem>>, %arg9: memref<1x32xf32, #tpu.memory_space<vmem>>, %arg10: memref<32x64xbf16, #tpu.memory_space<vmem>>, %arg11: memref<1x64xf32, #tpu.memory_space<vmem>>, %arg12: memref<64x128xbf16, #tpu.memory_space<vmem>>, %arg13: memref<1x128xf32, #tpu.memory_space<vmem>>, %arg14: memref<8x128xf32, #tpu.memory_space<vmem>>) attributes {dimension_semantics = [#tpu.dimension_semantics<parallel>], iteration_bounds = array<i64: 1>, scalar_prefetch = 0 : i64, scratch_operands = 0 : i64, tpu.core_type = #tpu.core_type<tc>, window_params = [{transform_indices = @transform_0, window_bounds = array<i64: 8, 128>}, {pipeline_mode = #tpu.pipeline_mode<synchronous>, transform_indices = @transform_1, window_bounds = array<i64: 128, 64>}, {pipeline_mode = #tpu.pipeline_mode<synchronous>, transform_indices = @transform_2, window_bounds = array<i64: 1, 64>}, {pipeline_mode = #tpu.pipeline_mode<synchronous>, transform_indices = @transform_3, window_bounds = array<i64: 64, 32>}, {pipeline_mode = #tpu.pipeline_mode<synchronous>, transform_indices = @transform_4, window_bounds = array<i64: 1, 32>}, {pipeline_mode = #tpu.pipeline_mode<synchronous>, transform_indices = @transform_5, window_bounds = array<i64: 32, 16>}, {pipeline_mode = #tpu.pipeline_mode<synchronous>, transform_indices = @transform_6, window_bounds = array<i64: 1, 16>}, {pipeline_mode = #tpu.pipeline_mode<synchronous>, transform_indices = @transform_7, window_bounds = array<i64: 16, 32>}, {pipeline_mode = #tpu.pipeline_mode<synchronous>, transform_indices = @transform_8, window_bounds = array<i64: 1, 32>}, {pipeline_mode = #tpu.pipeline_mode<synchronous>, transform_indices = @transform_9, window_bounds = array<i64: 32, 64>}, {pipeline_mode = #tpu.pipeline_mode<synchronous>, transform_indices = @transform_10, window_bounds = array<i64: 1, 64>}, {pipeline_mode = #tpu.pipeline_mode<synchronous>, transform_indices = @transform_11, window_bounds = array<i64: 64, 128>}, {pipeline_mode = #tpu.pipeline_mode<synchronous>, transform_indices = @transform_12, window_bounds = array<i64: 1, 128>}, {transform_indices = @transform_13, window_bounds = array<i64: 8, 128>}]} {
    %c0 = arith.constant 0 : index
    %c0_0 = arith.constant 0 : index
    %0 = vector.load %arg1[%c0, %c0_0] : memref<8x128xf32, #tpu.memory_space<vmem>>, vector<8x128xf32>
    %1 = arith.truncf %0 : vector<8x128xf32> to vector<8x128xbf16>
    %c0_1 = arith.constant 0 : index
    %c0_2 = arith.constant 0 : index
    %2 = vector.load %arg2[%c0_1, %c0_2] : memref<128x64xbf16, #tpu.memory_space<vmem>>, vector<128x64xbf16>
    %cst = arith.constant dense<0.000000e+00> : vector<8x64xf32>
    %3 = tpu.matmul %1, %2, %cst {dimension_numbers = #tpu.dot_dimension_numbers<[1], [0], [0], [1], [0, 0, 1, 1], [], []>} : vector<8x128xbf16>, vector<128x64xbf16>, vector<8x64xf32> -> vector<8x64xf32>
    %c0_3 = arith.constant 0 : index
    %c0_4 = arith.constant 0 : index
    %4 = vector.load %arg3[%c0_3, %c0_4] : memref<1x64xf32, #tpu.memory_space<vmem>>, vector<1x64xf32>
    %5 = vector.broadcast %4 : vector<1x64xf32> to vector<8x64xf32>
    %6 = arith.addf %3, %5 : vector<8x64xf32>
    %cst_5 = arith.constant 0.000000e+00 : f32
    %7 = vector.broadcast %cst_5 : f32 to vector<8x64xf32>
    %8 = arith.maximumf %6, %7 : vector<8x64xf32>
    %9 = arith.truncf %8 : vector<8x64xf32> to vector<8x64xbf16>
    %c0_6 = arith.constant 0 : index
    %c0_7 = arith.constant 0 : index
    %10 = vector.load %arg4[%c0_6, %c0_7] : memref<64x32xbf16, #tpu.memory_space<vmem>>, vector<64x32xbf16>
    %cst_8 = arith.constant dense<0.000000e+00> : vector<8x32xf32>
    %11 = tpu.matmul %9, %10, %cst_8 {dimension_numbers = #tpu.dot_dimension_numbers<[1], [0], [0], [1], [0, 0, 1, 1], [], []>} : vector<8x64xbf16>, vector<64x32xbf16>, vector<8x32xf32> -> vector<8x32xf32>
    %c0_9 = arith.constant 0 : index
    %c0_10 = arith.constant 0 : index
    %12 = vector.load %arg5[%c0_9, %c0_10] : memref<1x32xf32, #tpu.memory_space<vmem>>, vector<1x32xf32>
    %13 = vector.broadcast %12 : vector<1x32xf32> to vector<8x32xf32>
    %14 = arith.addf %11, %13 : vector<8x32xf32>
    %cst_11 = arith.constant 0.000000e+00 : f32
    %15 = vector.broadcast %cst_11 : f32 to vector<8x32xf32>
    %16 = arith.maximumf %14, %15 : vector<8x32xf32>
    %17 = arith.truncf %16 : vector<8x32xf32> to vector<8x32xbf16>
    %c0_12 = arith.constant 0 : index
    %c0_13 = arith.constant 0 : index
    %18 = vector.load %arg6[%c0_12, %c0_13] : memref<32x16xbf16, #tpu.memory_space<vmem>>, vector<32x16xbf16>
    %cst_14 = arith.constant dense<0.000000e+00> : vector<8x16xf32>
    %19 = tpu.matmul %17, %18, %cst_14 {dimension_numbers = #tpu.dot_dimension_numbers<[1], [0], [0], [1], [0, 0, 1, 1], [], []>} : vector<8x32xbf16>, vector<32x16xbf16>, vector<8x16xf32> -> vector<8x16xf32>
    %c0_15 = arith.constant 0 : index
    %c0_16 = arith.constant 0 : index
    %20 = vector.load %arg7[%c0_15, %c0_16] : memref<1x16xf32, #tpu.memory_space<vmem>>, vector<1x16xf32>
    %21 = vector.broadcast %20 : vector<1x16xf32> to vector<8x16xf32>
    %22 = arith.addf %19, %21 : vector<8x16xf32>
    %cst_17 = arith.constant 0.000000e+00 : f32
    %23 = vector.broadcast %cst_17 : f32 to vector<8x16xf32>
    %24 = arith.maximumf %22, %23 : vector<8x16xf32>
    %25 = arith.truncf %24 : vector<8x16xf32> to vector<8x16xbf16>
    %c0_18 = arith.constant 0 : index
    %c0_19 = arith.constant 0 : index
    %26 = vector.load %arg8[%c0_18, %c0_19] : memref<16x32xbf16, #tpu.memory_space<vmem>>, vector<16x32xbf16>
    %cst_20 = arith.constant dense<0.000000e+00> : vector<8x32xf32>
    %27 = tpu.matmul %25, %26, %cst_20 {dimension_numbers = #tpu.dot_dimension_numbers<[1], [0], [0], [1], [0, 0, 1, 1], [], []>} : vector<8x16xbf16>, vector<16x32xbf16>, vector<8x32xf32> -> vector<8x32xf32>
    %c0_21 = arith.constant 0 : index
    %c0_22 = arith.constant 0 : index
    %28 = vector.load %arg9[%c0_21, %c0_22] : memref<1x32xf32, #tpu.memory_space<vmem>>, vector<1x32xf32>
    %29 = vector.broadcast %28 : vector<1x32xf32> to vector<8x32xf32>
    %30 = arith.addf %27, %29 : vector<8x32xf32>
    %cst_23 = arith.constant 0.000000e+00 : f32
    %31 = vector.broadcast %cst_23 : f32 to vector<8x32xf32>
    %32 = arith.maximumf %30, %31 : vector<8x32xf32>
    %33 = arith.truncf %32 : vector<8x32xf32> to vector<8x32xbf16>
    %c0_24 = arith.constant 0 : index
    %c0_25 = arith.constant 0 : index
    %34 = vector.load %arg10[%c0_24, %c0_25] : memref<32x64xbf16, #tpu.memory_space<vmem>>, vector<32x64xbf16>
    %cst_26 = arith.constant dense<0.000000e+00> : vector<8x64xf32>
    %35 = tpu.matmul %33, %34, %cst_26 {dimension_numbers = #tpu.dot_dimension_numbers<[1], [0], [0], [1], [0, 0, 1, 1], [], []>} : vector<8x32xbf16>, vector<32x64xbf16>, vector<8x64xf32> -> vector<8x64xf32>
    %c0_27 = arith.constant 0 : index
    %c0_28 = arith.constant 0 : index
    %36 = vector.load %arg11[%c0_27, %c0_28] : memref<1x64xf32, #tpu.memory_space<vmem>>, vector<1x64xf32>
    %37 = vector.broadcast %36 : vector<1x64xf32> to vector<8x64xf32>
    %38 = arith.addf %35, %37 : vector<8x64xf32>
    %cst_29 = arith.constant 0.000000e+00 : f32
    %39 = vector.broadcast %cst_29 : f32 to vector<8x64xf32>
    %40 = arith.maximumf %38, %39 : vector<8x64xf32>
    %41 = arith.truncf %40 : vector<8x64xf32> to vector<8x64xbf16>
    %c0_30 = arith.constant 0 : index
    %c0_31 = arith.constant 0 : index
    %42 = vector.load %arg12[%c0_30, %c0_31] : memref<64x128xbf16, #tpu.memory_space<vmem>>, vector<64x128xbf16>
    %cst_32 = arith.constant dense<0.000000e+00> : vector<8x128xf32>
    %43 = tpu.matmul %41, %42, %cst_32 {dimension_numbers = #tpu.dot_dimension_numbers<[1], [0], [0], [1], [0, 0, 1, 1], [], []>} : vector<8x64xbf16>, vector<64x128xbf16>, vector<8x128xf32> -> vector<8x128xf32>
    %c0_33 = arith.constant 0 : index
    %c0_34 = arith.constant 0 : index
    %44 = vector.load %arg13[%c0_33, %c0_34] : memref<1x128xf32, #tpu.memory_space<vmem>>, vector<1x128xf32>
    %45 = vector.broadcast %44 : vector<1x128xf32> to vector<8x128xf32>
    %46 = arith.addf %43, %45 : vector<8x128xf32>
    %47 = arith.negf %46 : vector<8x128xf32>
    %48 = math.exp %47 : vector<8x128xf32>
    %cst_35 = arith.constant 1.000000e+00 : f32
    %49 = vector.broadcast %cst_35 : f32 to vector<8x128xf32>
    %50 = arith.addf %49, %48 : vector<8x128xf32>
    %51 = arith.divf %49, %50 : vector<8x128xf32>
    %c0_36 = arith.constant 0 : index
    %c0_37 = arith.constant 0 : index
    %52 = vector.load %arg14[%c0_36, %c0_37] : memref<8x128xf32, #tpu.memory_space<vmem>>, vector<8x128xf32>
    tpu.vector_store %arg14[%c0_36, %c0_37], %51 {strides = array<i32>} : memref<8x128xf32, #tpu.memory_space<vmem>>, vector<8x128xf32>,
    return
  }
  func.func @transform_0(%arg0: i32) -> (i32, i32) {
    %c0_i32 = arith.constant 0 : i32
    %c0_i32_0 = arith.constant 0 : i32
    return %arg0, %c0_i32 : i32, i32
  }
  func.func @transform_1(%arg0: i32) -> (i32, i32) {
    %c0_i32 = arith.constant 0 : i32
    %c0_i32_0 = arith.constant 0 : i32
    %c0_i32_1 = arith.constant 0 : i32
    return %c0_i32, %c0_i32_0 : i32, i32
  }
  func.func @transform_2(%arg0: i32) -> (i32, i32) {
    %c0_i32 = arith.constant 0 : i32
    %c0_i32_0 = arith.constant 0 : i32
    %c0_i32_1 = arith.constant 0 : i32
    return %c0_i32, %c0_i32_0 : i32, i32
  }
  func.func @transform_3(%arg0: i32) -> (i32, i32) {
    %c0_i32 = arith.constant 0 : i32
    %c0_i32_0 = arith.constant 0 : i32
    %c0_i32_1 = arith.constant 0 : i32
    return %c0_i32, %c0_i32_0 : i32, i32
  }
  func.func @transform_4(%arg0: i32) -> (i32, i32) {
    %c0_i32 = arith.constant 0 : i32
    %c0_i32_0 = arith.constant 0 : i32
    %c0_i32_1 = arith.constant 0 : i32
    return %c0_i32, %c0_i32_0 : i32, i32
  }
  func.func @transform_5(%arg0: i32) -> (i32, i32) {
    %c0_i32 = arith.constant 0 : i32
    %c0_i32_0 = arith.constant 0 : i32
    %c0_i32_1 = arith.constant 0 : i32
    return %c0_i32, %c0_i32_0 : i32, i32
  }
  func.func @transform_6(%arg0: i32) -> (i32, i32) {
    %c0_i32 = arith.constant 0 : i32
    %c0_i32_0 = arith.constant 0 : i32
    %c0_i32_1 = arith.constant 0 : i32
    return %c0_i32, %c0_i32_0 : i32, i32
  }
  func.func @transform_7(%arg0: i32) -> (i32, i32) {
    %c0_i32 = arith.constant 0 : i32
    %c0_i32_0 = arith.constant 0 : i32
    %c0_i32_1 = arith.constant 0 : i32
    return %c0_i32, %c0_i32_0 : i32, i32
  }
  func.func @transform_8(%arg0: i32) -> (i32, i32) {
    %c0_i32 = arith.constant 0 : i32
    %c0_i32_0 = arith.constant 0 : i32
    %c0_i32_1 = arith.constant 0 : i32
    return %c0_i32, %c0_i32_0 : i32, i32
  }
  func.func @transform_9(%arg0: i32) -> (i32, i32) {
    %c0_i32 = arith.constant 0 : i32
    %c0_i32_0 = arith.constant 0 : i32
    %c0_i32_1 = arith.constant 0 : i32
    return %c0_i32, %c0_i32_0 : i32, i32
  }
  func.func @transform_10(%arg0: i32) -> (i32, i32) {
    %c0_i32 = arith.constant 0 : i32
    %c0_i32_0 = arith.constant 0 : i32
    %c0_i32_1 = arith.constant 0 : i32
    return %c0_i32, %c0_i32_0 : i32, i32
  }
  func.func @transform_11(%arg0: i32) -> (i32, i32) {
    %c0_i32 = arith.constant 0 : i32
    %c0_i32_0 = arith.constant 0 : i32
    %c0_i32_1 = arith.constant 0 : i32
    return %c0_i32, %c0_i32_0 : i32, i32
  }
  func.func @transform_12(%arg0: i32) -> (i32, i32) {
    %c0_i32 = arith.constant 0 : i32
    %c0_i32_0 = arith.constant 0 : i32
    %c0_i32_1 = arith.constant 0 : i32
    return %c0_i32, %c0_i32_0 : i32, i32
  }
  func.func @transform_13(%arg0: i32) -> (i32, i32) {
    %c0_i32 = arith.constant 0 : i32
    %c0_i32_0 = arith.constant 0 : i32
    return %arg0, %c0_i32 : i32, i32
  }
}

</mosaic_0001>

<llo_original>
// kernel: autoencoder_forward.1
$region0: #{autoencoder_forward.1}
  #allocation0 [shape = 'u32[]', space=smem, size = 0x4, offset = 0x4, fixed_abs, tag = 'smem constant byte address 0x4 - core index']
  #allocation1 [shape = 'u32[144,128]{1,0:T(1,128)}', space=vmem, size = 0x12000, scoped, tag = 'internal scratch']
  %s0 = inlined_call_operand.vmem [shape: f32[8,128], index: 0, kind: input, shape index: {}]
  %s1 = inlined_call_operand.vmem [shape: bf16[128,64], index: 1, kind: input, shape index: {}]
  %s2 = inlined_call_operand.vmem [shape: f32[1,64], index: 2, kind: input, shape index: {}]
  %s3 = inlined_call_operand.vmem [shape: bf16[64,32], index: 3, kind: input, shape index: {}]
  %s4 = inlined_call_operand.vmem [shape: f32[1,32], index: 4, kind: input, shape index: {}]
  %s5 = inlined_call_operand.vmem [shape: bf16[32,16], index: 5, kind: input, shape index: {}]
  %s6 = inlined_call_operand.vmem [shape: f32[1,16], index: 6, kind: input, shape index: {}]
  %s7 = inlined_call_operand.vmem [shape: bf16[16,32], index: 7, kind: input, shape index: {}]
  %s8 = inlined_call_operand.vmem [shape: f32[1,32], index: 8, kind: input, shape index: {}]
  %s9 = inlined_call_operand.vmem [shape: bf16[32,64], index: 9, kind: input, shape index: {}]
  %s10 = inlined_call_operand.vmem [shape: f32[1,64], index: 10, kind: input, shape index: {}]
  %s11 = inlined_call_operand.vmem [shape: bf16[64,128], index: 11, kind: input, shape index: {}]
  %s12 = inlined_call_operand.vmem [shape: f32[1,128], index: 12, kind: input, shape index: {}]
  %s13 = inlined_call_operand.hbm [shape: f32[8,128], index: 13, kind: output, shape index: {}]
  %s14 = sld [smem:[#allocation0]]
  $region62: #{autoencoder_forward.1} parent=0
    _
  %s16 = ssub.s32 1, %s14
  %s17 = scalar_select 0, %s16, %s14
  $region1: #{autoencoder_forward.1} parent=0
    #allocation2 [shape = 'u8[4096]{0}', space=vmem, size = 0x1000, scoped, tag = 'output window, operand 0, single buffered']
    #allocation3 [shape = 's32[1]{0}', space=sflag, size = 0x4, scoped, tag = 'scoped memory for autoencoder_forward.1']
    %18 = vsyncpa [#allocation3], 0
    // Predicated region
    $region2: #{autoencoder_forward.1} parent=1 // pred_check
      _
    $region3: #{autoencoder_forward.1} parent=1 // pred_check_branch
      %20 = sbr.rel (0) target = $region5
    $region4: #{autoencoder_forward.1} parent=1 // pred_region
      _
    $region5: #{autoencoder_forward.1} parent=1 // pred_fallthru
      _
    // Predicated region
    $region6: #{autoencoder_forward.1} parent=1 // pred_check
      _
    $region7: #{autoencoder_forward.1} parent=1 // pred_check_branch
      %22 = sbr.rel (0) target = $region9
    $region8: #{autoencoder_forward.1} parent=1 // pred_region
      _
    $region9: #{autoencoder_forward.1} parent=1 // pred_fallthru
      _
    // Predicated region
    $region10: #{autoencoder_forward.1} parent=1 // pred_check
      _
    $region11: #{autoencoder_forward.1} parent=1 // pred_check_branch
      %24 = sbr.rel (0) target = $region13
    $region12: #{autoencoder_forward.1} parent=1 // pred_region
      _
    $region13: #{autoencoder_forward.1} parent=1 // pred_fallthru
      _
    // Predicated region
    $region14: #{autoencoder_forward.1} parent=1 // pred_check
      _
    $region15: #{autoencoder_forward.1} parent=1 // pred_check_branch
      %26 = sbr.rel (0) target = $region17
    $region16: #{autoencoder_forward.1} parent=1 // pred_region
      _
    $region17: #{autoencoder_forward.1} parent=1 // pred_fallthru
      _
    // Predicated region
    $region18: #{autoencoder_forward.1} parent=1 // pred_check
      _
    $region19: #{autoencoder_forward.1} parent=1 // pred_check_branch
      %28 = sbr.rel (0) target = $region21
    $region20: #{autoencoder_forward.1} parent=1 // pred_region
      _
    $region21: #{autoencoder_forward.1} parent=1 // pred_fallthru
      _
    // Predicated region
    $region22: #{autoencoder_forward.1} parent=1 // pred_check
      _
    $region23: #{autoencoder_forward.1} parent=1 // pred_check_branch
      %30 = sbr.rel (0) target = $region25
    $region24: #{autoencoder_forward.1} parent=1 // pred_region
      _
    $region25: #{autoencoder_forward.1} parent=1 // pred_fallthru
      _
    // Predicated region
    $region26: #{autoencoder_forward.1} parent=1 // pred_check
      _
    $region27: #{autoencoder_forward.1} parent=1 // pred_check_branch
      %32 = sbr.rel (0) target = $region29
    $region28: #{autoencoder_forward.1} parent=1 // pred_region
      _
    $region29: #{autoencoder_forward.1} parent=1 // pred_fallthru
      _
    // Predicated region
    $region30: #{autoencoder_forward.1} parent=1 // pred_check
      _
    $region31: #{autoencoder_forward.1} parent=1 // pred_check_branch
      %34 = sbr.rel (0) target = $region33
    $region32: #{autoencoder_forward.1} parent=1 // pred_region
      _
    $region33: #{autoencoder_forward.1} parent=1 // pred_fallthru
      _
    // Predicated region
    $region34: #{autoencoder_forward.1} parent=1 // pred_check
      _
    $region35: #{autoencoder_forward.1} parent=1 // pred_check_branch
      %36 = sbr.rel (0) target = $region37
    $region36: #{autoencoder_forward.1} parent=1 // pred_region
      _
    $region37: #{autoencoder_forward.1} parent=1 // pred_fallthru
      _
    // Predicated region
    $region38: #{autoencoder_forward.1} parent=1 // pred_check
      _
    $region39: #{autoencoder_forward.1} parent=1 // pred_check_branch
      %38 = sbr.rel (0) target = $region41
    $region40: #{autoencoder_forward.1} parent=1 // pred_region
      _
    $region41: #{autoencoder_forward.1} parent=1 // pred_fallthru
      _
    // Predicated region
    $region42: #{autoencoder_forward.1} parent=1 // pred_check
      _
    $region43: #{autoencoder_forward.1} parent=1 // pred_check_branch
      %40 = sbr.rel (0) target = $region45
    $region44: #{autoencoder_forward.1} parent=1 // pred_region
      _
    $region45: #{autoencoder_forward.1} parent=1 // pred_fallthru
      _
    // Predicated region
    $region46: #{autoencoder_forward.1} parent=1 // pred_check
      _
    $region47: #{autoencoder_forward.1} parent=1 // pred_check_branch
      %42 = sbr.rel (0) target = $region49
    $region48: #{autoencoder_forward.1} parent=1 // pred_region
      _
    $region49: #{autoencoder_forward.1} parent=1 // pred_fallthru
      _
    // Predicated region
    $region50: #{autoencoder_forward.1} parent=1 // pred_check
      _
    $region51: #{autoencoder_forward.1} parent=1 // pred_check_branch
      %44 = sbr.rel (0) target = $region53
    $region52: #{autoencoder_forward.1} parent=1 // pred_region
      _
    $region53: #{autoencoder_forward.1} parent=1 // pred_fallthru
      _
    %v46 = vld [vmem:[%s0] sm:$0xff]
    %v47 = vpack.c.bf16 %v46, %v46
    %v48 = vld [vmem:[%s1] sm:$0xf]
    %v49 = vld [vmem:[%s1 + $0x4] sm:$0xf]
    %v50 = vld [vmem:[%s1 + $0x8] sm:$0xf]
    %v51 = vld [vmem:[%s1 + $0xc] sm:$0xf]
    %v52 = vld [vmem:[%s1 + $0x10] sm:$0xf]
    %v53 = vld [vmem:[%s1 + $0x14] sm:$0xf]
    %v54 = vld [vmem:[%s1 + $0x18] sm:$0xf]
    %v55 = vld [vmem:[%s1 + $0x1c] sm:$0xf]
    %v56 = vld [vmem:[%s1 + $0x20] sm:$0xf]
    %v57 = vld [vmem:[%s1 + $0x24] sm:$0xf]
    %v58 = vld [vmem:[%s1 + $0x28] sm:$0xf]
    %v59 = vld [vmem:[%s1 + $0x2c] sm:$0xf]
    %v60 = vld [vmem:[%s1 + $0x30] sm:$0xf]
    %v61 = vld [vmem:[%s1 + $0x34] sm:$0xf]
    %v62 = vld [vmem:[%s1 + $0x38] sm:$0xf]
    %v63 = vld [vmem:[%s1 + $0x3c] sm:$0xf]
    %v64 = vld [vmem:[%s2] sm:$0x1]
    %v66 = vlaneseq
    %v67 = vshrl.u32 %v66, 7
    %v68 = vsub.s32 0, %v67
    %v69 = vrot.slane %v64, %v68
    %v87 = vunpack.c.l.b16 %v48
    %v88 = vunpack.c.l.b16 %v49
    %v89 = vunpack.c.l.b16 %v50
    %v90 = vunpack.c.l.b16 %v51
    %v91 = vunpack.c.l.b16 %v52
    %v92 = vunpack.c.l.b16 %v53
    %v93 = vunpack.c.l.b16 %v54
    %v94 = vunpack.c.l.b16 %v55
    %v95 = vunpack.c.l.b16 %v56
    %v96 = vunpack.c.l.b16 %v57
    %v97 = vunpack.c.l.b16 %v58
    %v98 = vunpack.c.l.b16 %v59
    %v99 = vunpack.c.l.b16 %v60
    %v100 = vunpack.c.l.b16 %v61
    %v101 = vunpack.c.l.b16 %v62
    %v102 = vunpack.c.l.b16 %v63
    %v103 = vpack.c.b16 %v88, %v87
    %v104 = vpack.c.b16 %v90, %v89
    %v105 = vpack.c.b16 %v92, %v91
    %v106 = vpack.c.b16 %v94, %v93
    %v107 = vpack.c.b16 %v96, %v95
    %v108 = vpack.c.b16 %v98, %v97
    %v109 = vpack.c.b16 %v100, %v99
    %v110 = vpack.c.b16 %v102, %v101
    %119 = vmatprep.subr.bf16.mxu0 0
    %120 = vmatpush1.bf16.msra.mxu0 %v103
    %121 = vmatprep.subr.bf16.mxu0 0
    %122 = vmatpush1.bf16.msra.mxu0 %v104
    %123 = vmatprep.subr.bf16.mxu0 0
    %124 = vmatpush1.bf16.msra.mxu0 %v105
    %125 = vmatprep.subr.bf16.mxu0 0
    %126 = vmatpush1.bf16.msra.mxu0 %v106
    %127 = vmatprep.subr.bf16.mxu0 0
    %128 = vmatpush1.bf16.msra.mxu0 %v107
    %129 = vmatprep.subr.bf16.mxu0 0
    %130 = vmatpush1.bf16.msra.mxu0 %v108
    %131 = vmatprep.subr.bf16.mxu0 0
    %132 = vmatpush1.bf16.msra.mxu0 %v109
    %133 = vmatprep.subr.bf16.mxu0 0
    %134 = vmatpush1.bf16.msra.mxu0 %v110
    %135 = vmatprep.subr.bf16.mxu0 0
    %136 = vmatpush1.bf16.msra.mxu0 0
    %137 = vmatprep.subr.bf16.mxu0 0
    %138 = vmatpush1.bf16.msra.mxu0 0
    %139 = vmatprep.subr.bf16.mxu0 0
    %140 = vmatpush1.bf16.msra.mxu0 0
    %141 = vmatprep.subr.bf16.mxu0 0
    %142 = vmatpush1.bf16.msra.mxu0 0
    %143 = vmatprep.subr.bf16.mxu0 0
    %144 = vmatpush1.bf16.msra.mxu0 0
    %145 = vmatprep.subr.bf16.mxu0 0
    %146 = vmatpush1.bf16.msra.mxu0 0
    %147 = vmatprep.subr.bf16.mxu0 0
    %148 = vmatpush1.bf16.msra.mxu0 0
    %149 = vmatprep.subr.bf16.mxu0 0
    %150 = vmatpush1.bf16.msra.mxu0 0
    %151 = vmatprep.mubr.bf16.mxu0 0
    %152 = vmatmul.mubr.bf16.gmra.mrb[0].mxu0 %v47
    %v153 = vpop.f32.mrb[0].mxu0
    %v154 = vadd.f32 %v69, %v153
    %v155 = vpop.f32.mrb[0].mxu0
    %v156 = vpop.f32.mrb[0].mxu0
    %v157 = vpop.f32.mrb[0].mxu0
    %158 = vdwg.mxu0
    %v159 = vmax.f32 %v154, 0.0
    %v160 = vpack.c.bf16 %v159, %v159
    %v161 = vld [vmem:[%s3] sm:$0xf]
    %v162 = vld [vmem:[%s3 + $0x4] sm:$0xf]
    %v163 = vld [vmem:[%s3 + $0x8] sm:$0xf]
    %v164 = vld [vmem:[%s3 + $0xc] sm:$0xf]
    %v165 = vld [vmem:[%s3 + $0x10] sm:$0xf]
    %v166 = vld [vmem:[%s3 + $0x14] sm:$0xf]
    %v167 = vld [vmem:[%s3 + $0x18] sm:$0xf]
    %v168 = vld [vmem:[%s3 + $0x1c] sm:$0xf]
    %v169 = vld [vmem:[%s4] sm:$0x1]
    %v171 = vlaneseq
    %v172 = vshrl.u32 %v171, 7
    %v173 = vsub.s32 0, %v172
    %v174 = vrot.slane %v169, %v173
    %v184 = vunpack.c.l.b16 %v161
    %v185 = vunpack.c.l.b16 %v162
    %v186 = vunpack.c.l.b16 %v163
    %v187 = vunpack.c.l.b16 %v164
    %v188 = vunpack.c.l.b16 %v165
    %v189 = vunpack.c.l.b16 %v166
    %v190 = vunpack.c.l.b16 %v167
    %v191 = vunpack.c.l.b16 %v168
    %v192 = vpack.c.b16 %v185, %v184
    %v193 = vpack.c.b16 %v187, %v186
    %v194 = vpack.c.b16 %v189, %v188
    %v195 = vpack.c.b16 %v191, %v190
    %vm200 = vcmask 523264
    %v202 = vsel %vm200, %v160, 0
    %204 = vmatprep.subr.bf16.mxu0 0
    %205 = vmatpush1.bf16.msra.mxu0 %v192
    %206 = vmatprep.subr.bf16.mxu0 0
    %207 = vmatpush1.bf16.msra.mxu0 %v193
    %208 = vmatprep.subr.bf16.mxu0 0
    %209 = vmatpush1.bf16.msra.mxu0 %v194
    %210 = vmatprep.subr.bf16.mxu0 0
    %211 = vmatpush1.bf16.msra.mxu0 %v195
    %212 = vmatprep.subr.bf16.mxu0 0
    %213 = vmatpush1.bf16.msra.mxu0 0
    %214 = vmatprep.subr.bf16.mxu0 0
    %215 = vmatpush1.bf16.msra.mxu0 0
    %216 = vmatprep.subr.bf16.mxu0 0
    %217 = vmatpush1.bf16.msra.mxu0 0
    %218 = vmatprep.subr.bf16.mxu0 0
    %219 = vmatpush1.bf16.msra.mxu0 0
    %220 = vmatprep.subr.bf16.mxu0 0
    %221 = vmatpush1.bf16.msra.mxu0 0
    %222 = vmatprep.subr.bf16.mxu0 0
    %223 = vmatpush1.bf16.msra.mxu0 0
    %224 = vmatprep.subr.bf16.mxu0 0
    %225 = vmatpush1.bf16.msra.mxu0 0
    %226 = vmatprep.subr.bf16.mxu0 0
    %227 = vmatpush1.bf16.msra.mxu0 0
    %228 = vmatprep.subr.bf16.mxu0 0
    %229 = vmatpush1.bf16.msra.mxu0 0
    %230 = vmatprep.subr.bf16.mxu0 0
    %231 = vmatpush1.bf16.msra.mxu0 0
    %232 = vmatprep.subr.bf16.mxu0 0
    %233 = vmatpush1.bf16.msra.mxu0 0
    %234 = vmatprep.subr.bf16.mxu0 0
    %235 = vmatpush1.bf16.msra.mxu0 0
    %236 = vmatprep.mubr.bf16.mxu0 0
    %237 = vmatmul.mubr.bf16.gmra.mrb[0].mxu0 %v202
    %v238 = vpop.f32.mrb[0].mxu0
    %v239 = vadd.f32 %v174, %v238
    %v240 = vpop.f32.mrb[0].mxu0
    %v241 = vpop.f32.mrb[0].mxu0
    %v242 = vpop.f32.mrb[0].mxu0
    %243 = vdwg.mxu0
    %v244 = vmax.f32 %v239, 0.0
    %v245 = vpack.c.bf16 %v244, %v244
    %v246 = vld [vmem:[%s5] sm:$0xf]
    %v247 = vld [vmem:[%s5 + $0x4] sm:$0xf]
    %v248 = vld [vmem:[%s5 + $0x8] sm:$0xf]
    %v249 = vld [vmem:[%s5 + $0xc] sm:$0xf]
    %v250 = vld [vmem:[%s6] sm:$0x1]
    %v252 = vlaneseq
    %v253 = vshrl.u32 %v252, 7
    %v254 = vsub.s32 0, %v253
    %v255 = vrot.slane %v250, %v254
    %v261 = vunpack.c.l.b16 %v246
    %v262 = vunpack.c.l.b16 %v247
    %v263 = vunpack.c.l.b16 %v248
    %v264 = vunpack.c.l.b16 %v249
    %v265 = vpack.c.b16 %v262, %v261
    %v266 = vpack.c.b16 %v264, %v263
    %vm269 = vcmask 261120
    %v271 = vsel %vm269, %v245, 0
    %273 = vmatprep.subr.bf16.mxu0 0
    %274 = vmatpush1.bf16.msra.mxu0 %v265
    %275 = vmatprep.subr.bf16.mxu0 0
    %276 = vmatpush1.bf16.msra.mxu0 %v266
    %277 = vmatprep.subr.bf16.mxu0 0
    %278 = vmatpush1.bf16.msra.mxu0 0
    %279 = vmatprep.subr.bf16.mxu0 0
    %280 = vmatpush1.bf16.msra.mxu0 0
    %281 = vmatprep.subr.bf16.mxu0 0
    %282 = vmatpush1.bf16.msra.mxu0 0
    %283 = vmatprep.subr.bf16.mxu0 0
    %284 = vmatpush1.bf16.msra.mxu0 0
    %285 = vmatprep.subr.bf16.mxu0 0
    %286 = vmatpush1.bf16.msra.mxu0 0
    %287 = vmatprep.subr.bf16.mxu0 0
    %288 = vmatpush1.bf16.msra.mxu0 0
    %289 = vmatprep.subr.bf16.mxu0 0
    %290 = vmatpush1.bf16.msra.mxu0 0
    %291 = vmatprep.subr.bf16.mxu0 0
    %292 = vmatpush1.bf16.msra.mxu0 0
    %293 = vmatprep.subr.bf16.mxu0 0
    %294 = vmatpush1.bf16.msra.mxu0 0
    %295 = vmatprep.subr.bf16.mxu0 0
    %296 = vmatpush1.bf16.msra.mxu0 0
    %297 = vmatprep.subr.bf16.mxu0 0
    %298 = vmatpush1.bf16.msra.mxu0 0
    %299 = vmatprep.subr.bf16.mxu0 0
    %300 = vmatpush1.bf16.msra.mxu0 0
    %301 = vmatprep.subr.bf16.mxu0 0
    %302 = vmatpush1.bf16.msra.mxu0 0
    %303 = vmatprep.subr.bf16.mxu0 0
    %304 = vmatpush1.bf16.msra.mxu0 0
    %305 = vmatprep.mubr.bf16.mxu0 0
    %306 = vmatmul.mubr.bf16.gmra.mrb[0].mxu0 %v271
    %v307 = vpop.f32.mrb[0].mxu0
    %v308 = vadd.f32 %v255, %v307
    %v309 = vpop.f32.mrb[0].mxu0
    %v310 = vpop.f32.mrb[0].mxu0
    %v311 = vpop.f32.mrb[0].mxu0
    %312 = vdwg.mxu0
    %v313 = vmax.f32 %v308, 0.0
    %v314 = vpack.c.bf16 %v313, %v313
    %v315 = vld [vmem:[%s7] sm:$0xf]
    %v316 = vld [vmem:[%s7 + $0x4] sm:$0xf]
    %v317 = vld [vmem:[%s8] sm:$0x1]
    %v319 = vlaneseq
    %v320 = vshrl.u32 %v319, 7
    %v321 = vsub.s32 0, %v320
    %v322 = vrot.slane %v317, %v321
    %v326 = vunpack.c.l.b16 %v315
    %v327 = vunpack.c.l.b16 %v316
    %v328 = vpack.c.b16 %v327, %v326
    %vm330 = vcmask 130048
    %v332 = vsel %vm330, %v314, 0
    %334 = vmatprep.subr.bf16.mxu0 0
    %335 = vmatpush1.bf16.msra.mxu0 %v328
    %336 = vmatprep.subr.bf16.mxu0 0
    %337 = vmatpush1.bf16.msra.mxu0 0
    %338 = vmatprep.subr.bf16.mxu0 0
    %339 = vmatpush1.bf16.msra.mxu0 0
    %340 = vmatprep.subr.bf16.mxu0 0
    %341 = vmatpush1.bf16.msra.mxu0 0
    %342 = vmatprep.subr.bf16.mxu0 0
    %343 = vmatpush1.bf16.msra.mxu0 0
    %344 = vmatprep.subr.bf16.mxu0 0
    %345 = vmatpush1.bf16.msra.mxu0 0
    %346 = vmatprep.subr.bf16.mxu0 0
    %347 = vmatpush1.bf16.msra.mxu0 0
    %348 = vmatprep.subr.bf16.mxu0 0
    %349 = vmatpush1.bf16.msra.mxu0 0
    %350 = vmatprep.subr.bf16.mxu0 0
    %351 = vmatpush1.bf16.msra.mxu0 0
    %352 = vmatprep.subr.bf16.mxu0 0
    %353 = vmatpush1.bf16.msra.mxu0 0
    %354 = vmatprep.subr.bf16.mxu0 0
    %355 = vmatpush1.bf16.msra.mxu0 0
    %356 = vmatprep.subr.bf16.mxu0 0
    %357 = vmatpush1.bf16.msra.mxu0 0
    %358 = vmatprep.subr.bf16.mxu0 0
    %359 = vmatpush1.bf16.msra.mxu0 0
    %360 = vmatprep.subr.bf16.mxu0 0
    %361 = vmatpush1.bf16.msra.mxu0 0
    %362 = vmatprep.subr.bf16.mxu0 0
    %363 = vmatpush1.bf16.msra.mxu0 0
    %364 = vmatprep.subr.bf16.mxu0 0
    %365 = vmatpush1.bf16.msra.mxu0 0
    %366 = vmatprep.mubr.bf16.mxu0 0
    %367 = vmatmul.mubr.bf16.gmra.mrb[0].mxu0 %v332
    %v368 = vpop.f32.mrb[0].mxu0
    %v369 = vadd.f32 %v322, %v368
    %v370 = vpop.f32.mrb[0].mxu0
    %v371 = vpop.f32.mrb[0].mxu0
    %v372 = vpop.f32.mrb[0].mxu0
    %373 = vdwg.mxu0
    %v374 = vmax.f32 %v369, 0.0
    %v375 = vpack.c.bf16 %v374, %v374
    %v376 = vld [vmem:[%s9] sm:$0xf]
    %v377 = vld [vmem:[%s9 + $0x4] sm:$0xf]
    %v378 = vld [vmem:[%s9 + $0x8] sm:$0xf]
    %v379 = vld [vmem:[%s9 + $0xc] sm:$0xf]
    %v380 = vld [vmem:[%s10] sm:$0x1]
    %v382 = vlaneseq
    %v383 = vshrl.u32 %v382, 7
    %v384 = vsub.s32 0, %v383
    %v385 = vrot.slane %v380, %v384
    %v391 = vunpack.c.l.b16 %v376
    %v392 = vunpack.c.l.b16 %v377
    %v393 = vunpack.c.l.b16 %v378
    %v394 = vunpack.c.l.b16 %v379
    %v395 = vpack.c.b16 %v392, %v391
    %v396 = vpack.c.b16 %v394, %v393
    %v400 = vsel %vm269, %v375, 0
    %402 = vmatprep.subr.bf16.mxu0 0
    %403 = vmatpush1.bf16.msra.mxu0 %v395
    %404 = vmatprep.subr.bf16.mxu0 0
    %405 = vmatpush1.bf16.msra.mxu0 %v396
    %406 = vmatprep.subr.bf16.mxu0 0
    %407 = vmatpush1.bf16.msra.mxu0 0
    %408 = vmatprep.subr.bf16.mxu0 0
    %409 = vmatpush1.bf16.msra.mxu0 0
    %410 = vmatprep.subr.bf16.mxu0 0
    %411 = vmatpush1.bf16.msra.mxu0 0
    %412 = vmatprep.subr.bf16.mxu0 0
    %413 = vmatpush1.bf16.msra.mxu0 0
    %414 = vmatprep.subr.bf16.mxu0 0
    %415 = vmatpush1.bf16.msra.mxu0 0
    %416 = vmatprep.subr.bf16.mxu0 0
    %417 = vmatpush1.bf16.msra.mxu0 0
    %418 = vmatprep.subr.bf16.mxu0 0
    %419 = vmatpush1.bf16.msra.mxu0 0
    %420 = vmatprep.subr.bf16.mxu0 0
    %421 = vmatpush1.bf16.msra.mxu0 0
    %422 = vmatprep.subr.bf16.mxu0 0
    %423 = vmatpush1.bf16.msra.mxu0 0
    %424 = vmatprep.subr.bf16.mxu0 0
    %425 = vmatpush1.bf16.msra.mxu0 0
    %426 = vmatprep.subr.bf16.mxu0 0
    %427 = vmatpush1.bf16.msra.mxu0 0
    %428 = vmatprep.subr.bf16.mxu0 0
    %429 = vmatpush1.bf16.msra.mxu0 0
    %430 = vmatprep.subr.bf16.mxu0 0
    %431 = vmatpush1.bf16.msra.mxu0 0
    %432 = vmatprep.subr.bf16.mxu0 0
    %433 = vmatpush1.bf16.msra.mxu0 0
    %434 = vmatprep.mubr.bf16.mxu0 0
    %435 = vmatmul.mubr.bf16.gmra.mrb[0].mxu0 %v400
    %v436 = vpop.f32.mrb[0].mxu0
    %v437 = vadd.f32 %v385, %v436
    %v438 = vpop.f32.mrb[0].mxu0
    %v439 = vpop.f32.mrb[0].mxu0
    %v440 = vpop.f32.mrb[0].mxu0
    %441 = vdwg.mxu0
    %v442 = vmax.f32 %v437, 0.0
    %v443 = vpack.c.bf16 %v442, %v442
    %v444 = vld [vmem:[%s11] sm:$0xf]
    %v445 = vld [vmem:[%s11 + $0x4] sm:$0xf]
    %v446 = vld [vmem:[%s11 + $0x8] sm:$0xf]
    %v447 = vld [vmem:[%s11 + $0xc] sm:$0xf]
    %v448 = vld [vmem:[%s11 + $0x10] sm:$0xf]
    %v449 = vld [vmem:[%s11 + $0x14] sm:$0xf]
    %v450 = vld [vmem:[%s11 + $0x18] sm:$0xf]
    %v451 = vld [vmem:[%s11 + $0x1c] sm:$0xf]
    %v452 = vld [vmem:[%s12] sm:$0x1]
    %v454 = vlaneseq
    %v455 = vshrl.u32 %v454, 7
    %v456 = vsub.s32 0, %v455
    %v457 = vrot.slane %v452, %v456
    %v467 = vunpack.c.l.b16 %v444
    %v468 = vunpack.c.l.b16 %v445
    %v469 = vunpack.c.l.b16 %v446
    %v470 = vunpack.c.l.b16 %v447
    %v471 = vunpack.c.l.b16 %v448
    %v472 = vunpack.c.l.b16 %v449
    %v473 = vunpack.c.l.b16 %v450
    %v474 = vunpack.c.l.b16 %v451
    %v475 = vpack.c.b16 %v468, %v467
    %v476 = vpack.c.b16 %v470, %v469
    %v477 = vpack.c.b16 %v472, %v471
    %v478 = vpack.c.b16 %v474, %v473
    %v484 = vsel %vm200, %v443, 0
    %486 = vmatprep.subr.bf16.mxu0 0
    %487 = vmatpush1.bf16.msra.mxu0 %v475
    %488 = vmatprep.subr.bf16.mxu0 0
    %489 = vmatpush1.bf16.msra.mxu0 %v476
    %490 = vmatprep.subr.bf16.mxu0 0
    %491 = vmatpush1.bf16.msra.mxu0 %v477
    %492 = vmatprep.subr.bf16.mxu0 0
    %493 = vmatpush1.bf16.msra.mxu0 %v478
    %494 = vmatprep.subr.bf16.mxu0 0
    %495 = vmatpush1.bf16.msra.mxu0 0
    %496 = vmatprep.subr.bf16.mxu0 0
    %497 = vmatpush1.bf16.msra.mxu0 0
    %498 = vmatprep.subr.bf16.mxu0 0
    %499 = vmatpush1.bf16.msra.mxu0 0
    %500 = vmatprep.subr.bf16.mxu0 0
    %501 = vmatpush1.bf16.msra.mxu0 0
    %502 = vmatprep.subr.bf16.mxu0 0
    %503 = vmatpush1.bf16.msra.mxu0 0
    %504 = vmatprep.subr.bf16.mxu0 0
    %505 = vmatpush1.bf16.msra.mxu0 0
    %506 = vmatprep.subr.bf16.mxu0 0
    %507 = vmatpush1.bf16.msra.mxu0 0
    %508 = vmatprep.subr.bf16.mxu0 0
    %509 = vmatpush1.bf16.msra.mxu0 0
    %510 = vmatprep.subr.bf16.mxu0 0
    %511 = vmatpush1.bf16.msra.mxu0 0
    %512 = vmatprep.subr.bf16.mxu0 0
    %513 = vmatpush1.bf16.msra.mxu0 0
    %514 = vmatprep.subr.bf16.mxu0 0
    %515 = vmatpush1.bf16.msra.mxu0 0
    %516 = vmatprep.subr.bf16.mxu0 0
    %517 = vmatpush1.bf16.msra.mxu0 0
    %518 = vmatprep.mubr.bf16.mxu0 0
    %519 = vmatmul.mubr.bf16.gmra.mrb[0].mxu0 %v484
    %v520 = vpop.f32.mrb[0].mxu0
    %v521 = vadd.f32 %v457, %v520
    %v522 = vpop.f32.mrb[0].mxu0
    %v523 = vpop.f32.mrb[0].mxu0
    %v524 = vpop.f32.mrb[0].mxu0
    %525 = vdwg.mxu0
    %v526 = vxor.u32 %v521, 2147483648
    %v527 = vmul.f32 %v526, 1.442695
    %v528 = vpow.pop %v527
    %v529 = vadd.f32 %v528, 1.0
    %v530 = vrcp.pop %v529
    %v531 = vmul.f32 1.0, %v530
    %532 = vst [vmem:[#allocation2] sm:$0xff] %v531
    // Predicated region
    $region54: #{autoencoder_forward.1} parent=1 // pred_check
      _
    $region55: #{autoencoder_forward.1} parent=1 // pred_check_branch
      %534 = sbr.rel (0) target = $region57
    $region56: #{autoencoder_forward.1} parent=1 // pred_region
      %s536 = ssub.s32 128, 128
      %537 = vsyncadd [#allocation3], %s536
      %s539 = sshll.u32 [#allocation2], 4
      %s540 = int_to_ptr.vmem [resolvable:$true] %s539
      %542 = dma.vmem_to_hbm [thread:$0]  %s540, 128, %s13, [#allocation3]
    $region57: #{autoencoder_forward.1} parent=1 // pred_fallthru
      _
    // Predicated region
    $region58: #{autoencoder_forward.1} parent=1 // pred_check
      _
    $region59: #{autoencoder_forward.1} parent=1 // pred_check_branch
      %544 = sbr.rel (0) target = $region61
    $region60: #{autoencoder_forward.1} parent=1 // pred_region
      %545 = dma.done [#allocation3], 128
    $region61: #{autoencoder_forward.1} parent=1 // pred_fallthru
      _
    %546 = vsyncpa [#allocation3], 1

</llo_original>
